<compile_context>
chip_gen: v6e
topology: v6e:2x2x1
jax: 0.10.0
libtpu: 0.0.40
codegen_flags: <defaults>
</compile_context>

<pallas_src>
import functools

import jax
import jax.numpy as jnp
from jax.experimental import pallas as pl
from jax.experimental.pallas import tpu as pltpu


def conv_mlp_kernel(x_ref, halo_ref, w_ref, b_ref, o_ref, *, compute_dtype):
    # x_ref:    (TL, Cin)      current sequence tile
    # halo_ref: (2, Cin)       [left halo row x[i*TL-1], right halo row x[(i+1)*TL]]
    #                          (zero rows at the sequence boundaries = conv padding)
    # w_ref:    (3*Cin, Cout)  fused conv taps [W0; W1; W2]
    # b_ref:    (1, Cout)
    # o_ref:    (TL, Cout)
    tl, cin = x_ref.shape
    x = x_ref[...]                                   # f32
    halo = halo_ref[...]                             # (2, Cin) f32

    row = jax.lax.broadcasted_iota(jnp.int32, (tl, cin), 0)

    # x_prev[r] = x[r-1]; row 0 comes from the left halo (zero for the first tile).
    x_prev = pltpu.roll(x, shift=1, axis=0)
    left = jnp.broadcast_to(halo[0:1, :], (tl, cin))
    x_prev = jnp.where(row == 0, left, x_prev)

    # x_next[r] = x[r+1]; row TL-1 comes from the right halo (zero for the last tile).
    x_next = pltpu.roll(x, shift=tl - 1, axis=0)
    right = jnp.broadcast_to(halo[1:2, :], (tl, cin))
    x_next = jnp.where(row == tl - 1, right, x_next)

    # im2col: one K = 3*Cin matmul instead of three K = Cin matmuls + VPU adds.
    lhs = jnp.concatenate([x_prev, x, x_next], axis=1).astype(compute_dtype)
    acc = jnp.dot(lhs, w_ref[...], preferred_element_type=jnp.float32)
    o_ref[...] = (acc + b_ref[...]).astype(o_ref.dtype)


def _pick_tile(L, target):
    """Largest multiple-of-8 divisor of L that is <= target (fallback: L itself)."""
    for t in range(min(target, L), 7, -1):
        if L % t == 0 and t % 8 == 0:
            return t
    return L


def conv_mlp_forward(x, w_torch, bias, *, tile_l=512, compute_dtype=jnp.float32):
    """x: (B, L, Cin) f32; w_torch: (Cout, Cin, 3) PyTorch Conv1d layout; bias: (Cout,).
    Returns (B, L, Cout) f32, identical to Conv_MLP.forward (dropout p=0)."""
    B, L, Cin = x.shape
    Cout = w_torch.shape[0]

    TL = _pick_tile(L, tile_l)
    NT = L // TL

    # Fused im2col weight: (Cout, Cin, 3) -> (3, Cin, Cout) -> (3*Cin, Cout).
    w_mm = jnp.transpose(w_torch, (2, 1, 0)).reshape(3 * Cin, Cout).astype(compute_dtype)
    b2d = bias.reshape(1, Cout).astype(jnp.float32)

    # Halo rows per tile (replaces the full jnp.pad of x: ~2x input HBM traffic saved).
    zrow = jnp.zeros((B, 1, Cin), x.dtype)
    if NT > 1:
        left = jnp.concatenate([zrow, x[:, TL - 1:L - 1:TL, :]], axis=1)   # (B, NT, Cin)
        right = jnp.concatenate([x[:, TL:L:TL, :], zrow], axis=1)          # (B, NT, Cin)
    else:
        left, right = zrow, zrow
    halo = jnp.stack([left, right], axis=2)                                # (B, NT, 2, Cin)

    kernel = functools.partial(conv_mlp_kernel, compute_dtype=compute_dtype)

    w_itm = int(jnp.dtype(compute_dtype).itemsize)
    flops = 2 * B * L * (3 * Cin) * Cout
    bytes_accessed = int(B * L * Cin * 4 + B * NT * 2 * Cin * 4
                         + (3 * Cin * Cout) * w_itm + Cout * 4
                         + B * L * Cout * 4)
    vmem_est = (2 * TL * Cin * 4            # x blocks (double-buffered)
                + 2 * TL * Cout * 4         # out blocks (double-buffered)
                + 3 * Cin * Cout * w_itm    # resident fused weight
                + TL * 3 * Cin * 4          # im2col LHS scratch
                + TL * Cout * 4)            # f32 accumulator
    vmem_limit = int(min(64 * 1024 * 1024, max(16 * 1024 * 1024, 2 * vmem_est)))
    # TODO(synk): for very large Cin*Cout, add a Cout tile axis so the fused weight
    # need not stay fully resident in VMEM (matters most on v7x's 64 MiB VMEM).

    return pl.pallas_call(
        kernel,
        out_shape=jax.ShapeDtypeStruct((B, L, Cout), x.dtype),
        grid_spec=pltpu.PrefetchScalarGridSpec(
            num_scalar_prefetch=0,
            grid=(B, NT),
            in_specs=[
                pl.BlockSpec((None, TL, Cin), lambda b, i: (b, i, 0)),
                pl.BlockSpec((None, None, 2, Cin), lambda b, i: (b, i, 0, 0)),
                pl.BlockSpec((3 * Cin, Cout), lambda b, i: (0, 0)),
                pl.BlockSpec((1, Cout), lambda b, i: (0, 0)),
            ],
            out_specs=pl.BlockSpec((None, TL, Cout), lambda b, i: (b, i, 0)),
        ),
        compiler_params=pltpu.CompilerParams(
            dimension_semantics=("parallel", "parallel"),
            vmem_limit_bytes=vmem_limit,
        ),
        cost_estimate=pl.CostEstimate(
            flops=flops, transcendentals=0, bytes_accessed=bytes_accessed),
    )(x, halo, w_mm, b2d)


def conv1d_reference(x, w, b):
    """Pure-JAX mirror of the PyTorch forward (transpose -> Conv1d -> transpose)."""
    x_ncl = jnp.transpose(x, (0, 2, 1))
    y = jax.lax.conv_general_dilated(
        x_ncl, w, window_strides=(1,), padding=((1, 1),),
        dimension_numbers=("NCH", "OIH", "NCH"))
    return jnp.transpose(y + b[None, :, None], (0, 2, 1))


if __name__ == "__main__":
    B, L, Cin, Cout = 2, 512, 128, 128

    key = jax.random.PRNGKey(0)
    kx, kw, kb = jax.random.split(key, 3)

    # Deterministic synthetic params (PyTorch Conv1d shapes: weight (Cout, Cin, 3), bias (Cout,)).
    x = jax.random.normal(kx, (B, L, Cin), dtype=jnp.float32)
    fan_in = Cin * 3
    bound = 1.0 / (fan_in ** 0.5)
    w = jax.random.uniform(kw, (Cout, Cin, 3), jnp.float32, -bound, bound)
    b = jax.random.uniform(kb, (Cout,), jnp.float32, -bound, bound)

    ref = conv1d_reference(x, w, b)

    # f32 path (tight tolerance); tile_l=128 -> grid (B=2, NT=4), exercises the halo logic.
    out = conv_mlp_forward(x, w, b, tile_l=128, compute_dtype=jnp.float32)
    out = jax.block_until_ready(out)
    assert out.shape == (B, L, Cout)
    assert jnp.allclose(out, ref, atol=1e-4, rtol=1e-4), float(jnp.max(jnp.abs(out - ref)))

    # bf16 MXU path (f32 accumulation), looser tolerance.
    out_bf16 = conv_mlp_forward(x, w, b, tile_l=128, compute_dtype=jnp.bfloat16)
    out_bf16 = jax.block_until_ready(out_bf16)
    assert jnp.allclose(out_bf16, ref, atol=5e-2, rtol=5e-2), \
        float(jnp.max(jnp.abs(out_bf16 - ref)))

    print("KERNEL_OK")
</pallas_src>

<mosaic_0001>
module attributes {stable_mosaic.version = 11 : i64} {
  func.func @conv_mlp_kernel(%arg0: i32, %arg1: i32, %arg2: memref<1x128x128xf32, #tpu.memory_space<vmem>>, %arg3: memref<1x1x2x128xf32, #tpu.memory_space<vmem>>, %arg4: memref<384x128xf32, #tpu.memory_space<vmem>>, %arg5: memref<1x128xf32, #tpu.memory_space<vmem>>, %arg6: memref<1x128x128xf32, #tpu.memory_space<vmem>>) attributes {dimension_semantics = [#tpu.dimension_semantics<parallel>, #tpu.dimension_semantics<parallel>], iteration_bounds = array<i64: 2, 4>, scalar_prefetch = 0 : i64, scratch_operands = 0 : i64, tpu.core_type = #tpu.core_type<tc>, window_params = [{transform_indices = @transform_0, window_bounds = array<i64: 1, 128, 128>}, {transform_indices = @transform_1, window_bounds = array<i64: 1, 1, 2, 128>}, {pipeline_mode = #tpu.pipeline_mode<synchronous>, transform_indices = @transform_2, window_bounds = array<i64: 384, 128>}, {pipeline_mode = #tpu.pipeline_mode<synchronous>, transform_indices = @transform_3, window_bounds = array<i64: 1, 128>}, {transform_indices = @transform_4, window_bounds = array<i64: 1, 128, 128>}]} {
    %c0 = arith.constant 0 : index
    %c0_0 = arith.constant 0 : index
    %c0_1 = arith.constant 0 : index
    %0 = vector.load %arg2[%c0, %c0_0, %c0_1] : memref<1x128x128xf32, #tpu.memory_space<vmem>>, vector<1x128x128xf32>
    %1 = vector.shape_cast %0 : vector<1x128x128xf32> to vector<128x128xf32>
    %c0_2 = arith.constant 0 : index
    %c0_3 = arith.constant 0 : index
    %c0_4 = arith.constant 0 : index
    %c0_5 = arith.constant 0 : index
    %2 = vector.load %arg3[%c0_2, %c0_3, %c0_4, %c0_5] : memref<1x1x2x128xf32, #tpu.memory_space<vmem>>, vector<1x1x2x128xf32>
    %3 = vector.shape_cast %2 : vector<1x1x2x128xf32> to vector<2x128xf32>
    %4 = tpu.iota {dimensions = array<i32: 0>} : vector<128x128xi32>
    %c1_i32 = arith.constant 1 : i32
    %5 = tpu.dynamic_rotate %1 by %c1_i32 dim 0 : vector<128x128xf32>, i32 -> vector<128x128xf32>
    %6 = vector.extract_strided_slice %3 {offsets = [0, 0], sizes = [1, 128], strides = [1, 1]} : vector<2x128xf32> to vector<1x128xf32>
    %7 = vector.shape_cast %6 : vector<1x128xf32> to vector<1x128xf32>
    %8 = vector.broadcast %7 : vector<1x128xf32> to vector<128x128xf32>
    %c0_i32 = arith.constant 0 : i32
    %9 = vector.broadcast %c0_i32 : i32 to vector<128x128xi32>
    %10 = arith.cmpi eq, %4, %9 : vector<128x128xi32>
    %11 = arith.select %10, %8, %5 : vector<128x128xi1>, vector<128x128xf32>
    %c127_i32 = arith.constant 127 : i32
    %12 = tpu.dynamic_rotate %1 by %c127_i32 dim 0 : vector<128x128xf32>, i32 -> vector<128x128xf32>
    %13 = vector.extract_strided_slice %3 {offsets = [1, 0], sizes = [1, 128], strides = [1, 1]} : vector<2x128xf32> to vector<1x128xf32>
    %14 = vector.shape_cast %13 : vector<1x128xf32> to vector<1x128xf32>
    %15 = vector.broadcast %14 : vector<1x128xf32> to vector<128x128xf32>
    %c127_i32_6 = arith.constant 127 : i32
    %16 = vector.broadcast %c127_i32_6 : i32 to vector<128x128xi32>
    %17 = arith.cmpi eq, %4, %16 : vector<128x128xi32>
    %18 = arith.select %17, %15, %12 : vector<128x128xi1>, vector<128x128xf32>
    %19 = tpu.concatenate %11, %1, %18 in 1 : vector<128x128xf32>, vector<128x128xf32>, vector<128x128xf32> -> vector<128x384xf32>
    %c0_7 = arith.constant 0 : index
    %c0_8 = arith.constant 0 : index
    %20 = vector.load %arg4[%c0_7, %c0_8] : memref<384x128xf32, #tpu.memory_space<vmem>>, vector<384x128xf32>
    %cst = arith.constant dense<0.000000e+00> : vector<128x128xf32>
    %21 = tpu.matmul %19, %20, %cst {dimension_numbers = #tpu.dot_dimension_numbers<[1], [0], [0], [1], [0, 0, 1, 1], [], []>} : vector<128x384xf32>, vector<384x128xf32>, vector<128x128xf32> -> vector<128x128xf32>
    %c0_9 = arith.constant 0 : index
    %c0_10 = arith.constant 0 : index
    %22 = vector.load %arg5[%c0_9, %c0_10] : memref<1x128xf32, #tpu.memory_space<vmem>>, vector<1x128xf32>
    %23 = vector.broadcast %22 : vector<1x128xf32> to vector<128x128xf32>
    %24 = arith.addf %21, %23 : vector<128x128xf32>
    %c0_11 = arith.constant 0 : index
    %c0_12 = arith.constant 0 : index
    %c0_13 = arith.constant 0 : index
    %25 = vector.load %arg6[%c0_11, %c0_12, %c0_13] : memref<1x128x128xf32, #tpu.memory_space<vmem>>, vector<1x128x128xf32>
    %26 = vector.shape_cast %25 : vector<1x128x128xf32> to vector<128x128xf32>
    %27 = vector.shape_cast %24 : vector<128x128xf32> to vector<1x128x128xf32>
    tpu.vector_store %arg6[%c0_11, %c0_12, %c0_13], %27 {strides = array<i32>} : memref<1x128x128xf32, #tpu.memory_space<vmem>>, vector<1x128x128xf32>,
    return
  }
  func.func @transform_0(%arg0: i32, %arg1: i32) -> (i32, i32, i32) {
    %c0_i32 = arith.constant 0 : i32
    %c0_i32_0 = arith.constant 0 : i32
    return %arg0, %arg1, %c0_i32 : i32, i32, i32
  }
  func.func @transform_1(%arg0: i32, %arg1: i32) -> (i32, i32, i32, i32) {
    %c0_i32 = arith.constant 0 : i32
    %c0_i32_0 = arith.constant 0 : i32
    %c0_i32_1 = arith.constant 0 : i32
    return %arg0, %arg1, %c0_i32, %c0_i32_0 : i32, i32, i32, i32
  }
  func.func @transform_2(%arg0: i32, %arg1: i32) -> (i32, i32) {
    %c0_i32 = arith.constant 0 : i32
    %c0_i32_0 = arith.constant 0 : i32
    %c0_i32_1 = arith.constant 0 : i32
    return %c0_i32, %c0_i32_0 : i32, i32
  }
  func.func @transform_3(%arg0: i32, %arg1: i32) -> (i32, i32) {
    %c0_i32 = arith.constant 0 : i32
    %c0_i32_0 = arith.constant 0 : i32
    %c0_i32_1 = arith.constant 0 : i32
    return %c0_i32, %c0_i32_0 : i32, i32
  }
  func.func @transform_4(%arg0: i32, %arg1: i32) -> (i32, i32, i32) {
    %c0_i32 = arith.constant 0 : i32
    %c0_i32_0 = arith.constant 0 : i32
    return %arg0, %arg1, %c0_i32 : i32, i32, i32
  }
}

</mosaic_0001>

<llo_original>
// kernel: tpu_custom_call.1
$region0: #{tpu_custom_call.1}
  #allocation0 [shape = 'u32[]', space=smem, size = 0x4, offset = 0x4, fixed_abs, tag = 'smem constant byte address 0x4 - core index']
  #allocation1 [shape = 'u32[144,128]{1,0:T(1,128)}', space=vmem, size = 0x12000, scoped, tag = 'internal scratch']
  %s0 = inlined_call_operand.hbm [shape: f32[2,512,128], index: 0, kind: input, shape index: {}]
  %s1 = inlined_call_operand.hbm [shape: f32[2,4,2,128], index: 1, kind: input, shape index: {}]
  %s2 = inlined_call_operand.hbm [shape: f32[384,128], index: 2, kind: input, shape index: {}]
  %s3 = inlined_call_operand.vmem [shape: f32[1,128], index: 3, kind: input, shape index: {}]
  %s4 = inlined_call_operand.hbm [shape: f32[2,512,128], index: 4, kind: output, shape index: {}]
  %s5 = sld [smem:[#allocation0]]
  $region61: #{tpu_custom_call.1} parent=0
    _
  %s7 = ssub.s32 1, %s5
  %s8 = scalar_select 0, %s7, %s5
  $region1: #{tpu_custom_call.1} parent=0
    #allocation2 [shape = 'u8[131072]{0}', space=vmem, size = 0x20000, scoped, tag = 'input window, operand 0']
    #allocation3 [shape = 's32[2]{0}', space=sflag, size = 0x8, scoped, tag = 'scoped memory for tpu_custom_call.1']
    #allocation4 [shape = 's32[2]{0}', space=sflag, size = 0x8, scoped, tag = 'scoped memory for tpu_custom_call.1']
    #allocation5 [shape = 'u8[2048]{0}', space=vmem, size = 0x800, scoped, tag = 'input window, operand 1']
    #allocation6 [shape = 's32[2]{0}', space=sflag, size = 0x8, scoped, tag = 'scoped memory for tpu_custom_call.1']
    #allocation7 [shape = 'u8[196608]{0}', space=vmem, size = 0x30000, scoped, tag = 'input window, operand 2, single buffered']
    #allocation8 [shape = 'u8[131072]{0}', space=vmem, size = 0x20000, scoped, tag = 'output window, operand 0']
    %9 = vsyncpa [#allocation3], 0
    %s10 = scalar_lea.sflag [#allocation3], 1
    %11 = vsyncpa %s10, 0
    %12 = vsyncpa [#allocation6], 0
    %s13 = scalar_lea.sflag [#allocation6], 1
    %14 = vsyncpa %s13, 0
    %15 = vsyncpa [#allocation4], 0
    %s16 = scalar_lea.sflag [#allocation4], 1
    %17 = vsyncpa %s16, 0
    loop: start=0, step=1, limit=10
    $region2: #{tpu_custom_call.1} parent=1 // loop_pre_header
      _
    $region3: #{tpu_custom_call.1} parent=1 // loop_header
      %s19 = sphi 0, %s23
      %p20 = scmp.ge.s32.totalorder %s19, 10
      %s26 = sphi 0, %s38
      %s27 = sphi 0, %s34
      %s28 = sphi 0, %s26
      %s29 = sphi 0, %s27
      %s30 = sphi 0, %s28
      %s31 = sphi 0, %s29
      %s43 = sphi 0, %s45
      %s46 = sphi 0, %s43
      %s47 = sphi 0, %s46
      %s63 = sphi 0, %s47
      %s71 = sphi 0, %s73
      %s74 = sphi 0, %s71
      %s75 = sphi 0, %s74
      %s91 = sphi 0, %s75
      %s95 = sphi 0, %s95
      %s97 = sphi 0, %s95
      %s98 = sphi 0, %s97
      %s112 = sphi 0, %s98
      %s116 = sphi 0, %s116
      %s118 = sphi 0, %s116
      %s119 = sphi 0, %s118
      %s133 = sphi 0, %s119
      %s141 = sphi 0, %s143
      %s144 = sphi 0, %s141
      %s145 = sphi 0, %s144
      %s161 = sphi 0, %s145
    $region4: #{tpu_custom_call.1} parent=1 // loop_header_branch
      %22 = sbr.rel (%p20) target = $region8
    $region5: #{tpu_custom_call.1} parent=1 // loop_body
      %s24 = ssub.s32 %s19, 1
      %s25 = ssub.s32 %s19, 2
      %s32 = sadd.s32 1, %s27
      %p33 = scmp.ge.s32.totalorder %s32, 4
      %s34 = scalar_select %p33, 0, %s32
      %s35 = sadd.s32 1, %s26
      %s36 = scalar_select %p33, %s35, %s26
      %p37 = scmp.ge.s32.totalorder %s36, 2
      %s38 = scalar_select %p37, 0, %s36
      %s39 = ssub.s32 %s26, %s38
      %s40 = ssub.s32 %s27, %s34
      %s41 = sor.u32 %s39, %s40
      %p42 = scmp.eq.s32.totalorder %s41, 0
      %s44 = sadd.s32 %s43, 1
      %s45 = scalar_select %p42, %s43, %s44
      %p48 = pneg %p42
      %p49 = scmp.eq.s32.totalorder %s19, 7
      %p50 = por %p48, %p49
      %p51 = scmp.ne.s32.totalorder %s43, %s46
      %p52 = scmp.eq.s32.totalorder %s19, 0
      %p53 = por %p51, %p52
      %p54 = scmp.ne.s32.totalorder %s43, %s46
      %p55 = scmp.eq.s32.totalorder %s24, 7
      %p56 = por %p54, %p55
      %p57 = scmp.ne.s32.totalorder %s46, %s47
      %p58 = scmp.eq.s32.totalorder %s24, 0
      %p59 = por %p57, %p58
      %p60 = scmp.ne.s32.totalorder %s46, %s47
      %p61 = scmp.eq.s32.totalorder %s25, 7
      %p62 = por %p60, %p61
      %p64 = scmp.ne.s32.totalorder %s47, %s63
      %p65 = scmp.eq.s32.totalorder %s25, 0
      %p66 = por %p64, %p65
      %s67 = ssub.s32 %s26, %s38
      %s68 = ssub.s32 %s27, %s34
      %s69 = sor.u32 %s67, %s68
      %p70 = scmp.eq.s32.totalorder %s69, 0
      %s72 = sadd.s32 %s71, 1
      %s73 = scalar_select %p70, %s71, %s72
      %p76 = pneg %p70
      %p77 = scmp.eq.s32.totalorder %s19, 7
      %p78 = por %p76, %p77
      %p79 = scmp.ne.s32.totalorder %s71, %s74
      %p80 = scmp.eq.s32.totalorder %s19, 0
      %p81 = por %p79, %p80
      %p82 = scmp.ne.s32.totalorder %s71, %s74
      %p83 = scmp.eq.s32.totalorder %s24, 7
      %p84 = por %p82, %p83
      %p85 = scmp.ne.s32.totalorder %s74, %s75
      %p86 = scmp.eq.s32.totalorder %s24, 0
      %p87 = por %p85, %p86
      %p88 = scmp.ne.s32.totalorder %s74, %s75
      %p89 = scmp.eq.s32.totalorder %s25, 7
      %p90 = por %p88, %p89
      %p92 = scmp.ne.s32.totalorder %s75, %s91
      %p93 = scmp.eq.s32.totalorder %s25, 0
      %p94 = por %p92, %p93
      %s96 = sadd.s32 %s95, 1
      %p99 = scmp.eq.s32.totalorder %s19, 7
      %p100 = scmp.ne.s32.totalorder %s95, %s97
      %p101 = scmp.eq.s32.totalorder %s19, 0
      %p102 = por %p100, %p101
      %p103 = scmp.ne.s32.totalorder %s95, %s97
      %p104 = scmp.eq.s32.totalorder %s24, 7
      %p105 = por %p103, %p104
      %p106 = scmp.ne.s32.totalorder %s97, %s98
      %p107 = scmp.eq.s32.totalorder %s24, 0
      %p108 = por %p106, %p107
      %p109 = scmp.ne.s32.totalorder %s97, %s98
      %p110 = scmp.eq.s32.totalorder %s25, 7
      %p111 = por %p109, %p110
      %p113 = scmp.ne.s32.totalorder %s98, %s112
      %p114 = scmp.eq.s32.totalorder %s25, 0
      %p115 = por %p113, %p114
      %s117 = sadd.s32 %s116, 1
      %p120 = scmp.eq.s32.totalorder %s19, 7
      %p121 = scmp.ne.s32.totalorder %s116, %s118
      %p122 = scmp.eq.s32.totalorder %s19, 0
      %p123 = por %p121, %p122
      %p124 = scmp.ne.s32.totalorder %s116, %s118
      %p125 = scmp.eq.s32.totalorder %s24, 7
      %p126 = por %p124, %p125
      %p127 = scmp.ne.s32.totalorder %s118, %s119
      %p128 = scmp.eq.s32.totalorder %s24, 0
      %p129 = por %p127, %p128
      %p130 = scmp.ne.s32.totalorder %s118, %s119
      %p131 = scmp.eq.s32.totalorder %s25, 7
      %p132 = por %p130, %p131
      %p134 = scmp.ne.s32.totalorder %s119, %s133
      %p135 = scmp.eq.s32.totalorder %s25, 0
      %p136 = por %p134, %p135
      %s137 = ssub.s32 %s26, %s38
      %s138 = ssub.s32 %s27, %s34
      %s139 = sor.u32 %s137, %s138
      %p140 = scmp.eq.s32.totalorder %s139, 0
      %s142 = sadd.s32 %s141, 1
      %s143 = scalar_select %p140, %s141, %s142
      %p146 = pneg %p140
      %p147 = scmp.eq.s32.totalorder %s19, 7
      %p148 = por %p146, %p147
      %p149 = scmp.ne.s32.totalorder %s141, %s144
      %p150 = scmp.eq.s32.totalorder %s19, 0
      %p151 = por %p149, %p150
      %p152 = scmp.ne.s32.totalorder %s141, %s144
      %p153 = scmp.eq.s32.totalorder %s24, 7
      %p154 = por %p152, %p153
      %p155 = scmp.ne.s32.totalorder %s144, %s145
      %p156 = scmp.eq.s32.totalorder %s24, 0
      %p157 = por %p155, %p156
      %p158 = scmp.ne.s32.totalorder %s144, %s145
      %p159 = scmp.eq.s32.totalorder %s25, 7
      %p160 = por %p158, %p159
      %p162 = scmp.ne.s32.totalorder %s145, %s161
      %p163 = scmp.eq.s32.totalorder %s25, 0
      %p164 = por %p162, %p163
      %p165 = scmp.le.s32.totalorder 1, %s19
      %p166 = scmp.lt.s32.totalorder %s19, 9
      %p167 = pnand %p165, %p166
      %p168 = pneg %p167
      // Predicated region
      $region9: #{tpu_custom_call.1} parent=5 // pred_check
        _
      $region10: #{tpu_custom_call.1} parent=5 // pred_check_branch
        %170 = sbr.rel (%p167) target = $region12
      $region11: #{tpu_custom_call.1} parent=5 // pred_region
        %s171 = ssub.s32 %s19, 1
        // Predicated region
        $region13: #{tpu_custom_call.1} parent=11 // pred_check
          %p172 = pneg %p108
        $region14: #{tpu_custom_call.1} parent=11 // pred_check_branch
          %174 = sbr.rel (%p172) target = $region16
        $region15: #{tpu_custom_call.1} parent=11 // pred_region
          %s176 = ssub.s32 6144, 6144
          %177 = vsyncadd [#allocation6], %s176
          %s178 = sshll.u32 [#allocation7], 4
          %s179 = int_to_ptr.vmem [resolvable:$true] %s178
          %184 = dma.hbm_to_vmem [thread:$0]  %s2, 6144, %s179, [#allocation6], 128, 128, 8
        $region16: #{tpu_custom_call.1} parent=11 // pred_fallthru
          _
        // Predicated region
        $region17: #{tpu_custom_call.1} parent=11 // pred_check
          %p185 = pneg %p129
        $region18: #{tpu_custom_call.1} parent=11 // pred_check_branch
          %187 = sbr.rel (%p185) target = $region20
        $region19: #{tpu_custom_call.1} parent=11 // pred_region
          _
        $region20: #{tpu_custom_call.1} parent=11 // pred_fallthru
          _
      $region12: #{tpu_custom_call.1} parent=5 // pred_fallthru
        _
      %p188 = scmp.lt.s32.totalorder %s19, 8
      // Predicated region
      $region21: #{tpu_custom_call.1} parent=5 // pred_check
        %p189 = pneg %p188
      $region22: #{tpu_custom_call.1} parent=5 // pred_check_branch
        %191 = sbr.rel (%p189) target = $region24
      $region23: #{tpu_custom_call.1} parent=5 // pred_region
        // Predicated region
        $region25: #{tpu_custom_call.1} parent=23 // pred_check
          %p192 = pneg %p53
        $region26: #{tpu_custom_call.1} parent=23 // pred_check_branch
          %194 = sbr.rel (%p192) target = $region28
        $region27: #{tpu_custom_call.1} parent=23 // pred_region
          %s195 = sand.u32 %s43, 1
          %s196 = scalar_lea.sflag [#allocation3], %s195
          %s197 = sand.u32 %s43, 1
          %s198 = smul.addr %s197, 128
          %s199 = scalar_lea.vmem [#allocation2], %s198
          %s200 = smul.u32 16, %s27
          %s202 = ssub.s32 2048, 2048
          %203 = vsyncadd %s196, %s202
          %s204 = smul.addr %s26, 64
          %s205 = sadd.s32 %s200, %s204
          %s206 = smul.addr %s205, 128
          %s207 = scalar_lea.hbm %s0, %s206
          %s208 = sshll.u32 %s199, 4
          %s209 = int_to_ptr.vmem [resolvable:$true] %s208
          %214 = dma.hbm_to_vmem [thread:$0]  %s207, 2048, %s209, %s196, 128, 128, 8
        $region28: #{tpu_custom_call.1} parent=23 // pred_fallthru
          _
        // Predicated region
        $region29: #{tpu_custom_call.1} parent=23 // pred_check
          %p215 = pneg %p81
        $region30: #{tpu_custom_call.1} parent=23 // pred_check_branch
          %217 = sbr.rel (%p215) target = $region32
        $region31: #{tpu_custom_call.1} parent=23 // pred_region
          %s218 = sand.u32 %s19, 1
          %s219 = scalar_lea.sflag [#allocation6], %s218
          %s220 = sand.u32 %s71, 1
          %s221 = smul.addr %s220, 2
          %s222 = scalar_lea.vmem [#allocation5], %s221
          %s224 = ssub.s32 32, 32
          %225 = vsyncadd %s219, %s224
          %s226 = smul.addr %s26, 4
          %s227 = sadd.s32 %s27, %s226
          %s228 = smul.addr %s227, 32
          %s229 = scalar_lea.hbm %s1, %s228
          %s231 = sshll.u32 %s222, 4
          %s232 = int_to_ptr.vmem [resolvable:$true] %s231
          %234 = dma.hbm_to_vmem [thread:$0]  %s229, 32, %s232, %s219
        $region32: #{tpu_custom_call.1} parent=23 // pred_fallthru
          _
      $region24: #{tpu_custom_call.1} parent=5 // pred_fallthru
        _
      %p235 = scmp.le.s32.totalorder 1, %s19
      %p236 = scmp.lt.s32.totalorder %s19, 9
      %p237 = pnand %p235, %p236
      %p238 = pneg %p237
      // Predicated region
      $region33: #{tpu_custom_call.1} parent=5 // pred_check
        _
      $region34: #{tpu_custom_call.1} parent=5 // pred_check_branch
        %240 = sbr.rel (%p237) target = $region36
      $region35: #{tpu_custom_call.1} parent=5 // pred_region
        %s241 = ssub.s32 %s19, 1
        %s242 = sand.u32 %s46, 1
        %s243 = scalar_lea.sflag [#allocation3], %s242
        %s244 = sand.u32 %s46, 1
        %s245 = smul.addr %s244, 128
        %s246 = scalar_lea.vmem [#allocation2], %s245
        // Predicated region
        $region37: #{tpu_custom_call.1} parent=35 // pred_check
          %p247 = pneg %p59
        $region38: #{tpu_custom_call.1} parent=35 // pred_check_branch
          %249 = sbr.rel (%p247) target = $region40
        $region39: #{tpu_custom_call.1} parent=35 // pred_region
          %250 = dma.done %s243, 2048
        $region40: #{tpu_custom_call.1} parent=35 // pred_fallthru
          _
        %s251 = sand.u32 %s24, 1
        %s252 = scalar_lea.sflag [#allocation6], %s251
        %s253 = sand.u32 %s74, 1
        %s254 = smul.addr %s253, 2
        %s255 = scalar_lea.vmem [#allocation5], %s254
        // Predicated region
        $region41: #{tpu_custom_call.1} parent=35 // pred_check
          %p256 = pneg %p87
        $region42: #{tpu_custom_call.1} parent=35 // pred_check_branch
          %258 = sbr.rel (%p256) target = $region44
        $region43: #{tpu_custom_call.1} parent=35 // pred_region
          %259 = dma.done %s252, 32
        $region44: #{tpu_custom_call.1} parent=35 // pred_fallthru
          _
        // Predicated region
        $region45: #{tpu_custom_call.1} parent=35 // pred_check
          %p260 = pneg %p108
        $region46: #{tpu_custom_call.1} parent=35 // pred_check_branch
          %262 = sbr.rel (%p260) target = $region48
        $region47: #{tpu_custom_call.1} parent=35 // pred_region
          %263 = dma.done [#allocation6], 6144
        $region48: #{tpu_custom_call.1} parent=35 // pred_fallthru
          _
        %s264 = sand.u32 %s46, 1
        %s265 = scalar_lea.sflag [#allocation3], %s264
        %s266 = sand.u32 %s46, 1
        %s267 = smul.addr %s266, 128
        %s268 = scalar_lea.vmem [#allocation2], %s267
        %p269 = pneg %p59
        %p270 = pneg %p56
        %s271 = sand.u32 %s24, 1
        %s272 = scalar_lea.sflag [#allocation6], %s271
        %s273 = sand.u32 %s74, 1
        %s274 = smul.addr %s273, 2
        %s275 = scalar_lea.vmem [#allocation5], %s274
        %p276 = pneg %p87
        %p277 = pneg %p84
        %p278 = pneg %p108
        %p279 = pneg %p105
        %p280 = pneg %p129
        %p281 = pneg %p126
        %p282 = pneg %p157
        %p283 = pneg %p154
        %s284 = sand.u32 %s144, 1
        %s285 = scalar_lea.sflag [#allocation4], %s284
        %s286 = sand.u32 %s144, 1
        %s287 = smul.addr %s286, 128
        %s288 = scalar_lea.vmem [#allocation8], %s287
        %s289 = smul.u32 16, %s29
        %s290 = smul.u32 16, %s29
        %v291 = vld [vmem:[%s246] sm:$0xff]
        %v292 = vld [vmem:[%s246 + $0x8] sm:$0xff]
        %v293 = vld [vmem:[%s246 + $0x10] sm:$0xff]
        %v294 = vld [vmem:[%s246 + $0x18] sm:$0xff]
        %v295 = vld [vmem:[%s246 + $0x20] sm:$0xff]
        %v296 = vld [vmem:[%s246 + $0x28] sm:$0xff]
        %v297 = vld [vmem:[%s246 + $0x30] sm:$0xff]
        %v298 = vld [vmem:[%s246 + $0x38] sm:$0xff]
        %v299 = vld [vmem:[%s246 + $0x40] sm:$0xff]
        %v300 = vld [vmem:[%s246 + $0x48] sm:$0xff]
        %v301 = vld [vmem:[%s246 + $0x50] sm:$0xff]
        %v302 = vld [vmem:[%s246 + $0x58] sm:$0xff]
        %v303 = vld [vmem:[%s246 + $0x60] sm:$0xff]
        %v304 = vld [vmem:[%s246 + $0x68] sm:$0xff]
        %v305 = vld [vmem:[%s246 + $0x70] sm:$0xff]
        %v306 = vld [vmem:[%s246 + $0x78] sm:$0xff]
        %v307 = vld [vmem:[%s255] sm:$0x3]
        %v308 = vlaneseq
        %v309 = vshrl.u32 %v308, 7
        %v310 = vadd.s32 %v309, 8
        %v311 = vadd.s32 %v309, 16
        %v312 = vadd.s32 %v309, 24
        %v313 = vadd.s32 %v309, 32
        %v314 = vadd.s32 %v309, 40
        %v315 = vadd.s32 %v309, 48
        %v316 = vadd.s32 %v309, 56
        %v317 = vadd.s32 %v309, 64
        %v318 = vadd.s32 %v309, 72
        %v319 = vadd.s32 %v309, 80
        %v320 = vadd.s32 %v309, 88
        %v321 = vadd.s32 %v309, 96
        %v322 = vadd.s32 %v309, 104
        %v323 = vadd.s32 %v309, 112
        %v324 = vadd.s32 %v309, 120
        %v325 = vrot.slane %v291, 7
        %v326 = vrot.slane %v292, 7
        %v327 = vrot.slane %v293, 7
        %v328 = vrot.slane %v294, 7
        %v329 = vrot.slane %v295, 7
        %v330 = vrot.slane %v296, 7
        %v331 = vrot.slane %v297, 7
        %v332 = vrot.slane %v298, 7
        %v333 = vrot.slane %v299, 7
        %v334 = vrot.slane %v300, 7
        %v335 = vrot.slane %v301, 7
        %v336 = vrot.slane %v302, 7
        %v337 = vrot.slane %v303, 7
        %v338 = vrot.slane %v304, 7
        %v339 = vrot.slane %v305, 7
        %v340 = vrot.slane %v306, 7
        %vm341 = vcmp.lt.s32.totalorder %v309, 1
        %v342 = vsel %vm341, %v339, %v340
        %v343 = vsel %vm341, %v338, %v339
        %v344 = vsel %vm341, %v337, %v338
        %v345 = vsel %vm341, %v336, %v337
        %v346 = vsel %vm341, %v335, %v336
        %v347 = vsel %vm341, %v334, %v335
        %v348 = vsel %vm341, %v333, %v334
        %v349 = vsel %vm341, %v332, %v333
        %v350 = vsel %vm341, %v331, %v332
        %v351 = vsel %vm341, %v330, %v331
        %v352 = vsel %vm341, %v329, %v330
        %v353 = vsel %vm341, %v328, %v329
        %v354 = vsel %vm341, %v327, %v328
        %v355 = vsel %vm341, %v326, %v327
        %v356 = vsel %vm341, %v325, %v326
        %v357 = vsel %vm341, %v340, %v325
        %v358 = vlaneseq
        %v359 = vshrl.u32 %v358, 7
        %v360 = vsub.s32 0, %v359
        %v361 = vrot.slane %v307, %v360
        %vm362 = vcmp.eq.s32.totalorder %v309, 0
        %vm363 = vcmp.eq.s32.totalorder %v310, 0
        %vm364 = vcmp.eq.s32.totalorder %v311, 0
        %vm365 = vcmp.eq.s32.totalorder %v312, 0
        %vm366 = vcmp.eq.s32.totalorder %v313, 0
        %vm367 = vcmp.eq.s32.totalorder %v314, 0
        %vm368 = vcmp.eq.s32.totalorder %v315, 0
        %vm369 = vcmp.eq.s32.totalorder %v316, 0
        %vm370 = vcmp.eq.s32.totalorder %v317, 0
        %vm371 = vcmp.eq.s32.totalorder %v318, 0
        %vm372 = vcmp.eq.s32.totalorder %v319, 0
        %vm373 = vcmp.eq.s32.totalorder %v320, 0
        %vm374 = vcmp.eq.s32.totalorder %v321, 0
        %vm375 = vcmp.eq.s32.totalorder %v322, 0
        %vm376 = vcmp.eq.s32.totalorder %v323, 0
        %vm377 = vcmp.eq.s32.totalorder %v324, 0
        %v378 = vsel %vm362, %v361, %v357
        %v379 = vsel %vm363, %v361, %v356
        %v380 = vsel %vm364, %v361, %v355
        %v381 = vsel %vm365, %v361, %v354
        %v382 = vsel %vm366, %v361, %v353
        %v383 = vsel %vm367, %v361, %v352
        %v384 = vsel %vm368, %v361, %v351
        %v385 = vsel %vm369, %v361, %v350
        %v386 = vsel %vm370, %v361, %v349
        %v387 = vsel %vm371, %v361, %v348
        %v388 = vsel %vm372, %v361, %v347
        %v389 = vsel %vm373, %v361, %v346
        %v390 = vsel %vm374, %v361, %v345
        %v391 = vsel %vm375, %v361, %v344
        %v392 = vsel %vm376, %v361, %v343
        %v393 = vsel %vm377, %v361, %v342
        %v394 = vrot.slane %v291, 1
        %v395 = vrot.slane %v292, 1
        %v396 = vrot.slane %v293, 1
        %v397 = vrot.slane %v294, 1
        %v398 = vrot.slane %v295, 1
        %v399 = vrot.slane %v296, 1
        %v400 = vrot.slane %v297, 1
        %v401 = vrot.slane %v298, 1
        %v402 = vrot.slane %v299, 1
        %v403 = vrot.slane %v300, 1
        %v404 = vrot.slane %v301, 1
        %v405 = vrot.slane %v302, 1
        %v406 = vrot.slane %v303, 1
        %v407 = vrot.slane %v304, 1
        %v408 = vrot.slane %v305, 1
        %v409 = vrot.slane %v306, 1
        %vm410 = vcmp.lt.s32.totalorder %v309, 7
        %v411 = vsel %vm410, %v408, %v409
        %v412 = vsel %vm410, %v407, %v408
        %v413 = vsel %vm410, %v406, %v407
        %v414 = vsel %vm410, %v405, %v406
        %v415 = vsel %vm410, %v404, %v405
        %v416 = vsel %vm410, %v403, %v404
        %v417 = vsel %vm410, %v402, %v403
        %v418 = vsel %vm410, %v401, %v402
        %v419 = vsel %vm410, %v400, %v401
        %v420 = vsel %vm410, %v399, %v400
        %v421 = vsel %vm410, %v398, %v399
        %v422 = vsel %vm410, %v397, %v398
        %v423 = vsel %vm410, %v396, %v397
        %v424 = vsel %vm410, %v395, %v396
        %v425 = vsel %vm410, %v394, %v395
        %v426 = vsel %vm410, %v409, %v394
        %v427 = vlaneseq
        %v428 = vshrl.u32 %v427, 7
        %v429 = vsub.s32 1, %v428
        %v430 = vrot.slane %v307, %v429
        %vm431 = vcmp.eq.s32.totalorder %v309, 127
        %vm432 = vcmp.eq.s32.totalorder %v310, 127
        %vm433 = vcmp.eq.s32.totalorder %v311, 127
        %vm434 = vcmp.eq.s32.totalorder %v312, 127
        %vm435 = vcmp.eq.s32.totalorder %v313, 127
        %vm436 = vcmp.eq.s32.totalorder %v314, 127
        %vm437 = vcmp.eq.s32.totalorder %v315, 127
        %vm438 = vcmp.eq.s32.totalorder %v316, 127
        %vm439 = vcmp.eq.s32.totalorder %v317, 127
        %vm440 = vcmp.eq.s32.totalorder %v318, 127
        %vm441 = vcmp.eq.s32.totalorder %v319, 127
        %vm442 = vcmp.eq.s32.totalorder %v320, 127
        %vm443 = vcmp.eq.s32.totalorder %v321, 127
        %vm444 = vcmp.eq.s32.totalorder %v322, 127
        %vm445 = vcmp.eq.s32.totalorder %v323, 127
        %vm446 = vcmp.eq.s32.totalorder %v324, 127
        %v447 = vsel %vm431, %v430, %v425
        %v448 = vsel %vm432, %v430, %v424
        %v449 = vsel %vm433, %v430, %v423
        %v450 = vsel %vm434, %v430, %v422
        %v451 = vsel %vm435, %v430, %v421
        %v452 = vsel %vm436, %v430, %v420
        %v453 = vsel %vm437, %v430, %v419
        %v454 = vsel %vm438, %v430, %v418
        %v455 = vsel %vm439, %v430, %v417
        %v456 = vsel %vm440, %v430, %v416
        %v457 = vsel %vm441, %v430, %v415
        %v458 = vsel %vm442, %v430, %v414
        %v459 = vsel %vm443, %v430, %v413
        %v460 = vsel %vm444, %v430, %v412
        %v461 = vsel %vm445, %v430, %v411
        %v462 = vsel %vm446, %v430, %v426
        %v463 = vld [vmem:[#allocation7] sm:$0xff]
        %v464 = vld [vmem:[#allocation7 + $0x8] sm:$0xff]
        %v465 = vld [vmem:[#allocation7 + $0x10] sm:$0xff]
        %v466 = vld [vmem:[#allocation7 + $0x18] sm:$0xff]
        %v467 = vld [vmem:[#allocation7 + $0x20] sm:$0xff]
        %v468 = vld [vmem:[#allocation7 + $0x28] sm:$0xff]
        %v469 = vld [vmem:[#allocation7 + $0x30] sm:$0xff]
        %v470 = vld [vmem:[#allocation7 + $0x38] sm:$0xff]
        %v471 = vld [vmem:[#allocation7 + $0x40] sm:$0xff]
        %v472 = vld [vmem:[#allocation7 + $0x48] sm:$0xff]
        %v473 = vld [vmem:[#allocation7 + $0x50] sm:$0xff]
        %v474 = vld [vmem:[#allocation7 + $0x58] sm:$0xff]
        %v475 = vld [vmem:[#allocation7 + $0x60] sm:$0xff]
        %v476 = vld [vmem:[#allocation7 + $0x68] sm:$0xff]
        %v477 = vld [vmem:[#allocation7 + $0x70] sm:$0xff]
        %v478 = vld [vmem:[#allocation7 + $0x78] sm:$0xff]
        %v479 = vld [vmem:[#allocation7 + $0x80] sm:$0xff]
        %v480 = vld [vmem:[#allocation7 + $0x88] sm:$0xff]
        %v481 = vld [vmem:[#allocation7 + $0x90] sm:$0xff]
        %v482 = vld [vmem:[#allocation7 + $0x98] sm:$0xff]
        %v483 = vld [vmem:[#allocation7 + $0xa0] sm:$0xff]
        %v484 = vld [vmem:[#allocation7 + $0xa8] sm:$0xff]
        %v485 = vld [vmem:[#allocation7 + $0xb0] sm:$0xff]
        %v486 = vld [vmem:[#allocation7 + $0xb8] sm:$0xff]
        %v487 = vld [vmem:[#allocation7 + $0xc0] sm:$0xff]
        %v488 = vld [vmem:[#allocation7 + $0xc8] sm:$0xff]
        %v489 = vld [vmem:[#allocation7 + $0xd0] sm:$0xff]
        %v490 = vld [vmem:[#allocation7 + $0xd8] sm:$0xff]
        %v491 = vld [vmem:[#allocation7 + $0xe0] sm:$0xff]
        %v492 = vld [vmem:[#allocation7 + $0xe8] sm:$0xff]
        %v493 = vld [vmem:[#allocation7 + $0xf0] sm:$0xff]
        %v494 = vld [vmem:[#allocation7 + $0xf8] sm:$0xff]
        %v495 = vld [vmem:[#allocation7 + $0x100] sm:$0xff]
        %v496 = vld [vmem:[#allocation7 + $0x108] sm:$0xff]
        %v497 = vld [vmem:[#allocation7 + $0x110] sm:$0xff]
        %v498 = vld [vmem:[#allocation7 + $0x118] sm:$0xff]
        %v499 = vld [vmem:[#allocation7 + $0x120] sm:$0xff]
        %v500 = vld [vmem:[#allocation7 + $0x128] sm:$0xff]
        %v501 = vld [vmem:[#allocation7 + $0x130] sm:$0xff]
        %v502 = vld [vmem:[#allocation7 + $0x138] sm:$0xff]
        %v503 = vld [vmem:[#allocation7 + $0x140] sm:$0xff]
        %v504 = vld [vmem:[#allocation7 + $0x148] sm:$0xff]
        %v505 = vld [vmem:[#allocation7 + $0x150] sm:$0xff]
        %v506 = vld [vmem:[#allocation7 + $0x158] sm:$0xff]
        %v507 = vld [vmem:[#allocation7 + $0x160] sm:$0xff]
        %v508 = vld [vmem:[#allocation7 + $0x168] sm:$0xff]
        %v509 = vld [vmem:[#allocation7 + $0x170] sm:$0xff]
        %v510 = vld [vmem:[#allocation7 + $0x178] sm:$0xff]
        %v511 = vld [vmem:[%s3] sm:$0x1]
        %v513 = vlaneseq
        %v514 = vshrl.u32 %v513, 7
        %v515 = vsub.s32 0, %v514
        %v516 = vrot.slane %v511, %v515
        %518 = vmatprep.subr.mxu0 0.0
        %519 = vmatpush1.msra.mxu0 %v478
        %520 = vmatprep.subr.mxu0 0.0
        %521 = vmatpush1.msra.mxu0 %v477
        %522 = vmatprep.subr.mxu0 0.0
        %523 = vmatpush1.msra.mxu0 %v476
        %524 = vmatprep.subr.mxu0 0.0
        %525 = vmatpush1.msra.mxu0 %v475
        %526 = vmatprep.subr.mxu0 0.0
        %527 = vmatpush1.msra.mxu0 %v474
        %528 = vmatprep.subr.mxu0 0.0
        %529 = vmatpush1.msra.mxu0 %v473
        %530 = vmatprep.subr.mxu0 0.0
        %531 = vmatpush1.msra.mxu0 %v472
        %532 = vmatprep.subr.mxu0 0.0
        %533 = vmatpush1.msra.mxu0 %v471
        %534 = vmatprep.subr.mxu0 0.0
        %535 = vmatpush1.msra.mxu0 %v470
        %536 = vmatprep.subr.mxu0 0.0
        %537 = vmatpush1.msra.mxu0 %v469
        %538 = vmatprep.subr.mxu0 0.0
        %539 = vmatpush1.msra.mxu0 %v468
        %540 = vmatprep.subr.mxu0 0.0
        %541 = vmatpush1.msra.mxu0 %v467
        %542 = vmatprep.subr.mxu0 0.0
        %543 = vmatpush1.msra.mxu0 %v466
        %544 = vmatprep.subr.mxu0 0.0
        %545 = vmatpush1.msra.mxu0 %v465
        %546 = vmatprep.subr.mxu0 0.0
        %547 = vmatpush1.msra.mxu0 %v464
        %548 = vmatprep.subr.mxu0 0.0
        %549 = vmatpush1.msra.mxu0 %v463
        %550 = vmatprep.subr.mxu0 0.0
        %551 = vmatpush2.msra.mxu0 %v494
        %552 = vmatprep.subr.mxu0 0.0
        %553 = vmatpush2.msra.mxu0 %v493
        %554 = vmatprep.subr.mxu0 0.0
        %555 = vmatpush2.msra.mxu0 %v492
        %556 = vmatprep.subr.mxu0 0.0
        %557 = vmatpush2.msra.mxu0 %v491
        %558 = vmatprep.subr.mxu0 0.0
        %559 = vmatpush2.msra.mxu0 %v490
        %560 = vmatprep.subr.mxu0 0.0
        %561 = vmatpush2.msra.mxu0 %v489
        %562 = vmatprep.subr.mxu0 0.0
        %563 = vmatpush2.msra.mxu0 %v488
        %564 = vmatprep.subr.mxu0 0.0
        %565 = vmatpush2.msra.mxu0 %v487
        %566 = vmatprep.subr.mxu0 0.0
        %567 = vmatpush2.msra.mxu0 %v486
        %568 = vmatprep.subr.mxu0 0.0
        %569 = vmatpush2.msra.mxu0 %v485
        %570 = vmatprep.subr.mxu0 0.0
        %571 = vmatpush2.msra.mxu0 %v484
        %572 = vmatprep.subr.mxu0 0.0
        %573 = vmatpush2.msra.mxu0 %v483
        %574 = vmatprep.subr.mxu0 0.0
        %575 = vmatpush2.msra.mxu0 %v482
        %576 = vmatprep.subr.mxu0 0.0
        %577 = vmatpush2.msra.mxu0 %v481
        %578 = vmatprep.subr.mxu0 0.0
        %579 = vmatpush2.msra.mxu0 %v480
        %580 = vmatprep.subr.mxu0 0.0
        %581 = vmatpush2.msra.mxu0 %v479
        %582 = vmatprep.mubr.f32.mxu0 %v291
        %583 = vmatmul.mubr.f32.gmra.mxu0 %v378
        %v584 = vpop.f32.mrf.mxu0
        %v585 = vadd.f32 %v516, %v584
        %v586 = vpop.f32.mrf.mxu0
        %587 = vmatprep.mubr.f32.mxu0 %v292
        %588 = vmatmul.mubr.f32.gmra.mxu0 %v379
        %v589 = vpop.f32.mrf.mxu0
        %v590 = vadd.f32 %v516, %v589
        %v591 = vpop.f32.mrf.mxu0
        %592 = vmatprep.mubr.f32.mxu0 %v293
        %593 = vmatmul.mubr.f32.gmra.mxu0 %v380
        %v594 = vpop.f32.mrf.mxu0
        %v595 = vadd.f32 %v516, %v594
        %v596 = vpop.f32.mrf.mxu0
        %597 = vmatprep.mubr.f32.mxu0 %v294
        %598 = vmatmul.mubr.f32.gmra.mxu0 %v381
        %v599 = vpop.f32.mrf.mxu0
        %v600 = vadd.f32 %v516, %v599
        %v601 = vpop.f32.mrf.mxu0
        %602 = vmatprep.mubr.f32.mxu0 %v295
        %603 = vmatmul.mubr.f32.gmra.mxu0 %v382
        %v604 = vpop.f32.mrf.mxu0
        %v605 = vadd.f32 %v516, %v604
        %v606 = vpop.f32.mrf.mxu0
        %607 = vmatprep.mubr.f32.mxu0 %v296
        %608 = vmatmul.mubr.f32.gmra.mxu0 %v383
        %v609 = vpop.f32.mrf.mxu0
        %v610 = vadd.f32 %v516, %v609
        %v611 = vpop.f32.mrf.mxu0
        %612 = vmatprep.mubr.f32.mxu0 %v297
        %613 = vmatmul.mubr.f32.gmra.mxu0 %v384
        %v614 = vpop.f32.mrf.mxu0
        %v615 = vadd.f32 %v516, %v614
        %v616 = vpop.f32.mrf.mxu0
        %617 = vmatprep.mubr.f32.mxu0 %v298
        %618 = vmatmul.mubr.f32.gmra.mxu0 %v385
        %v619 = vpop.f32.mrf.mxu0
        %v620 = vadd.f32 %v516, %v619
        %v621 = vpop.f32.mrf.mxu0
        %622 = vmatprep.mubr.f32.mxu0 %v299
        %623 = vmatmul.mubr.f32.gmra.mxu0 %v386
        %v624 = vpop.f32.mrf.mxu0
        %v625 = vadd.f32 %v516, %v624
        %v626 = vpop.f32.mrf.mxu0
        %627 = vmatprep.mubr.f32.mxu0 %v300
        %628 = vmatmul.mubr.f32.gmra.mxu0 %v387
        %v629 = vpop.f32.mrf.mxu0
        %v630 = vadd.f32 %v516, %v629
        %v631 = vpop.f32.mrf.mxu0
        %632 = vmatprep.mubr.f32.mxu0 %v301
        %633 = vmatmul.mubr.f32.gmra.mxu0 %v388
        %v634 = vpop.f32.mrf.mxu0
        %v635 = vadd.f32 %v516, %v634
        %v636 = vpop.f32.mrf.mxu0
        %637 = vmatprep.mubr.f32.mxu0 %v302
        %638 = vmatmul.mubr.f32.gmra.mxu0 %v389
        %v639 = vpop.f32.mrf.mxu0
        %v640 = vadd.f32 %v516, %v639
        %v641 = vpop.f32.mrf.mxu0
        %642 = vmatprep.mubr.f32.mxu0 %v303
        %643 = vmatmul.mubr.f32.gmra.mxu0 %v390
        %v644 = vpop.f32.mrf.mxu0
        %v645 = vadd.f32 %v516, %v644
        %v646 = vpop.f32.mrf.mxu0
        %647 = vmatprep.mubr.f32.mxu0 %v304
        %648 = vmatmul.mubr.f32.gmra.mxu0 %v391
        %v649 = vpop.f32.mrf.mxu0
        %v650 = vadd.f32 %v516, %v649
        %v651 = vpop.f32.mrf.mxu0
        %652 = vmatprep.mubr.f32.mxu0 %v305
        %653 = vmatmul.mubr.f32.gmra.mxu0 %v392
        %v654 = vpop.f32.mrf.mxu0
        %v655 = vadd.f32 %v516, %v654
        %v656 = vpop.f32.mrf.mxu0
        %657 = vmatprep.mubr.f32.mxu0 %v306
        %658 = vmatmul.mubr.f32.gmra.mxu0 %v393
        %v659 = vpop.f32.mrf.mxu0
        %v660 = vadd.f32 %v516, %v659
        %v661 = vpop.f32.mrf.mxu0
        %662 = vdwg.mxu0
        %663 = vmatprep.subr.mxu0 0.0
        %664 = vmatpush1.msra.mxu0 %v510
        %665 = vmatprep.subr.mxu0 0.0
        %666 = vmatpush1.msra.mxu0 %v509
        %667 = vmatprep.subr.mxu0 0.0
        %668 = vmatpush1.msra.mxu0 %v508
        %669 = vmatprep.subr.mxu0 0.0
        %670 = vmatpush1.msra.mxu0 %v507
        %671 = vmatprep.subr.mxu0 0.0
        %672 = vmatpush1.msra.mxu0 %v506
        %673 = vmatprep.subr.mxu0 0.0
        %674 = vmatpush1.msra.mxu0 %v505
        %675 = vmatprep.subr.mxu0 0.0
        %676 = vmatpush1.msra.mxu0 %v504
        %677 = vmatprep.subr.mxu0 0.0
        %678 = vmatpush1.msra.mxu0 %v503
        %679 = vmatprep.subr.mxu0 0.0
        %680 = vmatpush1.msra.mxu0 %v502
        %681 = vmatprep.subr.mxu0 0.0
        %682 = vmatpush1.msra.mxu0 %v501
        %683 = vmatprep.subr.mxu0 0.0
        %684 = vmatpush1.msra.mxu0 %v500
        %685 = vmatprep.subr.mxu0 0.0
        %686 = vmatpush1.msra.mxu0 %v499
        %687 = vmatprep.subr.mxu0 0.0
        %688 = vmatpush1.msra.mxu0 %v498
        %689 = vmatprep.subr.mxu0 0.0
        %690 = vmatpush1.msra.mxu0 %v497
        %691 = vmatprep.subr.mxu0 0.0
        %692 = vmatpush1.msra.mxu0 %v496
        %693 = vmatprep.subr.mxu0 0.0
        %694 = vmatpush1.msra.mxu0 %v495
        %695 = vmatprep.subr.mxu0 0.0
        %696 = vmatpush2.msra.mxu0 0.0
        %697 = vmatprep.subr.mxu0 0.0
        %698 = vmatpush2.msra.mxu0 0.0
        %699 = vmatprep.subr.mxu0 0.0
        %700 = vmatpush2.msra.mxu0 0.0
        %701 = vmatprep.subr.mxu0 0.0
        %702 = vmatpush2.msra.mxu0 0.0
        %703 = vmatprep.subr.mxu0 0.0
        %704 = vmatpush2.msra.mxu0 0.0
        %705 = vmatprep.subr.mxu0 0.0
        %706 = vmatpush2.msra.mxu0 0.0
        %707 = vmatprep.subr.mxu0 0.0
        %708 = vmatpush2.msra.mxu0 0.0
        %709 = vmatprep.subr.mxu0 0.0
        %710 = vmatpush2.msra.mxu0 0.0
        %711 = vmatprep.subr.mxu0 0.0
        %712 = vmatpush2.msra.mxu0 0.0
        %713 = vmatprep.subr.mxu0 0.0
        %714 = vmatpush2.msra.mxu0 0.0
        %715 = vmatprep.subr.mxu0 0.0
        %716 = vmatpush2.msra.mxu0 0.0
        %717 = vmatprep.subr.mxu0 0.0
        %718 = vmatpush2.msra.mxu0 0.0
        %719 = vmatprep.subr.mxu0 0.0
        %720 = vmatpush2.msra.mxu0 0.0
        %721 = vmatprep.subr.mxu0 0.0
        %722 = vmatpush2.msra.mxu0 0.0
        %723 = vmatprep.subr.mxu0 0.0
        %724 = vmatpush2.msra.mxu0 0.0
        %725 = vmatprep.subr.mxu0 0.0
        %726 = vmatpush2.msra.mxu0 0.0
        %727 = vmatprep.mubr.f32.mxu0 0.0
        %728 = vmatmul.mubr.f32.gmra.mxu0 %v447
        %v729 = vpop.f32.mrf.mxu0
        %v730 = vadd.f32 %v585, %v729
        %v731 = vpop.f32.mrf.mxu0
        %732 = vmatprep.mubr.f32.mxu0 0.0
        %733 = vmatmul.mubr.f32.gmra.mxu0 %v448
        %v734 = vpop.f32.mrf.mxu0
        %v735 = vadd.f32 %v590, %v734
        %v736 = vpop.f32.mrf.mxu0
        %737 = vmatprep.mubr.f32.mxu0 0.0
        %738 = vmatmul.mubr.f32.gmra.mxu0 %v449
        %v739 = vpop.f32.mrf.mxu0
        %v740 = vadd.f32 %v595, %v739
        %v741 = vpop.f32.mrf.mxu0
        %742 = vmatprep.mubr.f32.mxu0 0.0
        %743 = vmatmul.mubr.f32.gmra.mxu0 %v450
        %v744 = vpop.f32.mrf.mxu0
        %v745 = vadd.f32 %v600, %v744
        %v746 = vpop.f32.mrf.mxu0
        %747 = vmatprep.mubr.f32.mxu0 0.0
        %748 = vmatmul.mubr.f32.gmra.mxu0 %v451
        %v749 = vpop.f32.mrf.mxu0
        %v750 = vadd.f32 %v605, %v749
        %v751 = vpop.f32.mrf.mxu0
        %752 = vmatprep.mubr.f32.mxu0 0.0
        %753 = vmatmul.mubr.f32.gmra.mxu0 %v452
        %v754 = vpop.f32.mrf.mxu0
        %v755 = vadd.f32 %v610, %v754
        %v756 = vpop.f32.mrf.mxu0
        %757 = vmatprep.mubr.f32.mxu0 0.0
        %758 = vmatmul.mubr.f32.gmra.mxu0 %v453
        %v759 = vpop.f32.mrf.mxu0
        %v760 = vadd.f32 %v615, %v759
        %v761 = vpop.f32.mrf.mxu0
        %762 = vmatprep.mubr.f32.mxu0 0.0
        %763 = vmatmul.mubr.f32.gmra.mxu0 %v454
        %v764 = vpop.f32.mrf.mxu0
        %v765 = vadd.f32 %v620, %v764
        %v766 = vpop.f32.mrf.mxu0
        %767 = vmatprep.mubr.f32.mxu0 0.0
        %768 = vmatmul.mubr.f32.gmra.mxu0 %v455
        %v769 = vpop.f32.mrf.mxu0
        %v770 = vadd.f32 %v625, %v769
        %v771 = vpop.f32.mrf.mxu0
        %772 = vmatprep.mubr.f32.mxu0 0.0
        %773 = vmatmul.mubr.f32.gmra.mxu0 %v456
        %v774 = vpop.f32.mrf.mxu0
        %v775 = vadd.f32 %v630, %v774
        %v776 = vpop.f32.mrf.mxu0
        %777 = vmatprep.mubr.f32.mxu0 0.0
        %778 = vmatmul.mubr.f32.gmra.mxu0 %v457
        %v779 = vpop.f32.mrf.mxu0
        %v780 = vadd.f32 %v635, %v779
        %v781 = vpop.f32.mrf.mxu0
        %782 = vmatprep.mubr.f32.mxu0 0.0
        %783 = vmatmul.mubr.f32.gmra.mxu0 %v458
        %v784 = vpop.f32.mrf.mxu0
        %v785 = vadd.f32 %v640, %v784
        %v786 = vpop.f32.mrf.mxu0
        %787 = vmatprep.mubr.f32.mxu0 0.0
        %788 = vmatmul.mubr.f32.gmra.mxu0 %v459
        %v789 = vpop.f32.mrf.mxu0
        %v790 = vadd.f32 %v645, %v789
        %v791 = vpop.f32.mrf.mxu0
        %792 = vmatprep.mubr.f32.mxu0 0.0
        %793 = vmatmul.mubr.f32.gmra.mxu0 %v460
        %v794 = vpop.f32.mrf.mxu0
        %v795 = vadd.f32 %v650, %v794
        %v796 = vpop.f32.mrf.mxu0
        %797 = vmatprep.mubr.f32.mxu0 0.0
        %798 = vmatmul.mubr.f32.gmra.mxu0 %v461
        %v799 = vpop.f32.mrf.mxu0
        %v800 = vadd.f32 %v655, %v799
        %v801 = vpop.f32.mrf.mxu0
        %802 = vmatprep.mubr.f32.mxu0 0.0
        %803 = vmatmul.mubr.f32.gmra.mxu0 %v462
        %v804 = vpop.f32.mrf.mxu0
        %v805 = vadd.f32 %v660, %v804
        %v806 = vpop.f32.mrf.mxu0
        %807 = vdwg.mxu0
        %808 = vst [vmem:[%s288] sm:$0xff] %v730
        %809 = vst [vmem:[%s288 + $0x8] sm:$0xff] %v735
        %810 = vst [vmem:[%s288 + $0x10] sm:$0xff] %v740
        %811 = vst [vmem:[%s288 + $0x18] sm:$0xff] %v745
        %812 = vst [vmem:[%s288 + $0x20] sm:$0xff] %v750
        %813 = vst [vmem:[%s288 + $0x28] sm:$0xff] %v755
        %814 = vst [vmem:[%s288 + $0x30] sm:$0xff] %v760
        %815 = vst [vmem:[%s288 + $0x38] sm:$0xff] %v765
        %816 = vst [vmem:[%s288 + $0x40] sm:$0xff] %v770
        %817 = vst [vmem:[%s288 + $0x48] sm:$0xff] %v775
        %818 = vst [vmem:[%s288 + $0x50] sm:$0xff] %v780
        %819 = vst [vmem:[%s288 + $0x58] sm:$0xff] %v785
        %820 = vst [vmem:[%s288 + $0x60] sm:$0xff] %v790
        %821 = vst [vmem:[%s288 + $0x68] sm:$0xff] %v795
        %822 = vst [vmem:[%s288 + $0x70] sm:$0xff] %v800
        %823 = vst [vmem:[%s288 + $0x78] sm:$0xff] %v805
        %s824 = sand.u32 %s144, 1
        %s825 = scalar_lea.sflag [#allocation4], %s824
        %s826 = sand.u32 %s144, 1
        %s827 = smul.addr %s826, 128
        %s828 = scalar_lea.vmem [#allocation8], %s827
        // Predicated region
        $region49: #{tpu_custom_call.1} parent=35 // pred_check
          %p829 = pneg %p154
        $region50: #{tpu_custom_call.1} parent=35 // pred_check_branch
          %831 = sbr.rel (%p829) target = $region52
        $region51: #{tpu_custom_call.1} parent=35 // pred_region
          %s832 = smul.u32 16, %s29
          %s834 = ssub.s32 2048, 2048
          %835 = vsyncadd %s825, %s834
          %s836 = smul.addr %s28, 64
          %s837 = sadd.s32 %s832, %s836
          %s838 = smul.addr %s837, 128
          %s839 = scalar_lea.hbm %s4, %s838
          %s840 = sshll.u32 %s828, 4
          %s841 = int_to_ptr.vmem [resolvable:$true] %s840
          %846 = dma.vmem_to_hbm [thread:$0]  %s841, 2048, %s839, %s825, 128, 128, 8
        $region52: #{tpu_custom_call.1} parent=35 // pred_fallthru
          _
      $region36: #{tpu_custom_call.1} parent=5 // pred_fallthru
        _
      %p847 = scmp.le.s32.totalorder 2, %s19
      // Predicated region
      $region53: #{tpu_custom_call.1} parent=5 // pred_check
        %p848 = pneg %p847
      $region54: #{tpu_custom_call.1} parent=5 // pred_check_branch
        %850 = sbr.rel (%p848) target = $region56
      $region55: #{tpu_custom_call.1} parent=5 // pred_region
        %s851 = ssub.s32 %s19, 2
        // Predicated region
        $region57: #{tpu_custom_call.1} parent=55 // pred_check
          %p852 = pneg %p160
        $region58: #{tpu_custom_call.1} parent=55 // pred_check_branch
          %854 = sbr.rel (%p852) target = $region60
        $region59: #{tpu_custom_call.1} parent=55 // pred_region
          %s855 = sand.u32 %s145, 1
          %s856 = scalar_lea.sflag [#allocation4], %s855
          %s857 = sand.u32 %s145, 1
          %s858 = smul.addr %s857, 128
          %s859 = scalar_lea.vmem [#allocation8], %s858
          %860 = dma.done %s856, 2048
        $region60: #{tpu_custom_call.1} parent=55 // pred_fallthru
          _
      $region56: #{tpu_custom_call.1} parent=5 // pred_fallthru
        _
    $region6: #{tpu_custom_call.1} parent=1 // loop_footer
      %s23 = sadd.s32 1, %s19
    $region7: #{tpu_custom_call.1} parent=1 // loop_footer_branch
      %18 = sbr.rel target = $region3
    $region8: #{tpu_custom_call.1} parent=1 // loop_exit
      _
    %861 = vsyncpa [#allocation3], 1
    %s862 = scalar_lea.sflag [#allocation3], 1
    %863 = vsyncpa %s862, 1
    %864 = vsyncpa [#allocation6], 1
    %s865 = scalar_lea.sflag [#allocation6], 1
    %866 = vsyncpa %s865, 1
    %867 = vsyncpa [#allocation4], 1
    %s868 = scalar_lea.sflag [#allocation4], 1
    %869 = vsyncpa %s868, 1

</llo_original>
